<compile_context>
chip_gen: v7x
topology: tpu7x:2x2x1
jax: 0.10.0
libtpu: 0.0.40
codegen_flags: <defaults>
</compile_context>

<pallas_src>
import functools
import math

import jax
import jax.numpy as jnp
from jax.experimental import pallas as pl
from jax.experimental.pallas import tpu as pltpu


def _mult_noise_kernel(x_ref, u_ref, p_ref, out_ref, *, N, ret_noise):
    # Bernoulli(p): one compare per element; p is (1, N) and broadcasts over
    # the (Bt, N) batch tile.
    noise = (u_ref[...] < p_ref[...]).astype(x_ref.dtype)
    if ret_noise:
        out_ref[:, 0:N] = noise * x_ref[...]     # lane-aligned slice (N % 128 friendly)
        out_ref[:, N:2 * N] = noise
    else:
        out_ref[...] = noise * x_ref[...]


def multiplicative_noise_combiner(x, unsquashed_weights, key, ret_noise=True,
                                  block_bytes_cap=1 << 20):
    """x: (B, C, H, W); unsquashed_weights: (1, C, H, W); key: jax PRNG key.

    Returns (B, 2C, H, W) if ret_noise else (B, C, H, W).
    """
    B = x.shape[0]
    N = math.prod(x.shape[1:])                       # C*H*W, flattened lane axis
    x2 = x.reshape(B, N)

    # Hoisted out of the kernel: keep-probability, computed once.
    p = jax.nn.sigmoid(unsquashed_weights.astype(jnp.float32)).reshape(1, N)

    # Pre-generated uniforms in [0, 1): one independent draw per batch element.
    # TODO(synk): switch to in-kernel pltpu.prng_random_bits once the CPU
    # interpreter supports it; the current form is bit-equivalent Bernoulli(p).
    u = jax.random.uniform(key, (B, N), dtype=jnp.float32)

    out_N = 2 * N if ret_noise else N

    # Batch tile: largest divisor of B whose x-block stays <= ~1 MiB
    # (keeps double-buffered inputs+output well under the smallest scoped
    #  VMEM default across v5e/v6e/v7x).
    row_bytes = N * x2.dtype.itemsize
    bt = 1
    for d in range(B, 0, -1):
        if B % d == 0 and d * row_bytes <= block_bytes_cap:
            bt = d
            break
    grid = (B // bt,)

    kernel = functools.partial(_mult_noise_kernel, N=N, ret_noise=ret_noise)
    out = pl.pallas_call(
        kernel,
        out_shape=jax.ShapeDtypeStruct((B, out_N), x.dtype),
        grid_spec=pltpu.PrefetchScalarGridSpec(
            num_scalar_prefetch=0,
            grid=grid,
            in_specs=[
                pl.BlockSpec((bt, N), lambda i: (i, 0)),    # x
                pl.BlockSpec((bt, N), lambda i: (i, 0)),    # uniforms
                pl.BlockSpec((1, N), lambda i: (0, 0)),     # p, resident
            ],
            out_specs=pl.BlockSpec((bt, out_N), lambda i: (i, 0)),
        ),
        compiler_params=pltpu.CompilerParams(
            # Batch axis is embarrassingly parallel -> shards across the two
            # TensorCores on v7x; harmless on v5e/v6e.
            dimension_semantics=("parallel",)),
    )(x2, u, p)

    if ret_noise:
        # Row layout is [x_obf(C*H*W) ++ noise(C*H*W)] -> plain reshape gives
        # channel-concat order [x_obf channels, noise channels].
        return out.reshape(B, 2 * x.shape[1], *x.shape[2:])
    return out.reshape(x.shape)


if __name__ == "__main__":
    B, C, H, W = 2, 4, 16, 16
    key = jax.random.PRNGKey(0)
    kx, kn = jax.random.split(key)
    x = jax.random.normal(kx, (B, C, H, W), dtype=jnp.float32)

    # Module's init_weights: nn.init.constant_(unsquashed_weights, 0.0)
    # -> sigmoid(0) = 0.5 keep-probability everywhere.
    unsquashed_weights = jnp.zeros((1, C, H, W), dtype=jnp.float32)

    out = multiplicative_noise_combiner(x, unsquashed_weights, kn, ret_noise=True)
    out = jax.block_until_ready(out)

    assert out.shape == (B, 2 * C, H, W), out.shape
    x_obf, noise = out[:, :C], out[:, C:]
    # noise must be exactly 0/1, and x_obf must equal noise * x
    assert bool(jnp.all((noise == 0.0) | (noise == 1.0)))
    assert bool(jnp.allclose(x_obf, noise * x))
    print("KERNEL_OK")
</pallas_src>

<mosaic_0001>
module attributes {stable_mosaic.version = 11 : i64} {
  func.func @_mult_noise_kernel(%arg0: i32, %arg1: memref<2x1024xf32, #tpu.memory_space<vmem>>, %arg2: memref<2x1024xf32, #tpu.memory_space<vmem>>, %arg3: memref<1x1024xf32, #tpu.memory_space<vmem>>, %arg4: memref<2x2048xf32, #tpu.memory_space<vmem>>) attributes {dimension_semantics = [#tpu.dimension_semantics<parallel>], iteration_bounds = array<i64: 1>, scalar_prefetch = 0 : i64, scratch_operands = 0 : i64, tpu.core_type = #tpu.core_type<tc>, window_params = [{transform_indices = @transform_0, window_bounds = array<i64: 2, 1024>}, {transform_indices = @transform_1, window_bounds = array<i64: 2, 1024>}, {pipeline_mode = #tpu.pipeline_mode<synchronous>, transform_indices = @transform_2, window_bounds = array<i64: 1, 1024>}, {transform_indices = @transform_3, window_bounds = array<i64: 2, 2048>}]} {
    %c0 = arith.constant 0 : index
    %c0_0 = arith.constant 0 : index
    %0 = vector.load %arg2[%c0, %c0_0] : memref<2x1024xf32, #tpu.memory_space<vmem>>, vector<2x1024xf32>
    %c0_1 = arith.constant 0 : index
    %c0_2 = arith.constant 0 : index
    %1 = vector.load %arg3[%c0_1, %c0_2] : memref<1x1024xf32, #tpu.memory_space<vmem>>, vector<1x1024xf32>
    %2 = vector.broadcast %1 : vector<1x1024xf32> to vector<2x1024xf32>
    %3 = arith.cmpf olt, %0, %2 : vector<2x1024xf32>
    %4 = arith.extui %3 : vector<2x1024xi1> to vector<2x1024xi32>
    %5 = arith.sitofp %4 : vector<2x1024xi32> to vector<2x1024xf32>
    %c0_3 = arith.constant 0 : index
    %c0_4 = arith.constant 0 : index
    %6 = vector.load %arg1[%c0_3, %c0_4] : memref<2x1024xf32, #tpu.memory_space<vmem>>, vector<2x1024xf32>
    %7 = arith.mulf %5, %6 : vector<2x1024xf32>
    %c0_5 = arith.constant 0 : index
    %c0_6 = arith.constant 0 : index
    %8 = vector.load %arg4[%c0_5, %c0_6] : memref<2x2048xf32, #tpu.memory_space<vmem>>, vector<2x1024xf32>
    tpu.vector_store %arg4[%c0_5, %c0_6], %7 {strides = array<i32>} : memref<2x2048xf32, #tpu.memory_space<vmem>>, vector<2x1024xf32>,
    %c0_7 = arith.constant 0 : index
    %c1024 = arith.constant 1024 : index
    %9 = vector.load %arg4[%c0_7, %c1024] : memref<2x2048xf32, #tpu.memory_space<vmem>>, vector<2x1024xf32>
    tpu.vector_store %arg4[%c0_7, %c1024], %5 {strides = array<i32>} : memref<2x2048xf32, #tpu.memory_space<vmem>>, vector<2x1024xf32>,
    return
  }
  func.func @transform_0(%arg0: i32) -> (i32, i32) {
    %c0_i32 = arith.constant 0 : i32
    %c0_i32_0 = arith.constant 0 : i32
    return %arg0, %c0_i32 : i32, i32
  }
  func.func @transform_1(%arg0: i32) -> (i32, i32) {
    %c0_i32 = arith.constant 0 : i32
    %c0_i32_0 = arith.constant 0 : i32
    return %arg0, %c0_i32 : i32, i32
  }
  func.func @transform_2(%arg0: i32) -> (i32, i32) {
    %c0_i32 = arith.constant 0 : i32
    %c0_i32_0 = arith.constant 0 : i32
    %c0_i32_1 = arith.constant 0 : i32
    return %c0_i32, %c0_i32_0 : i32, i32
  }
  func.func @transform_3(%arg0: i32) -> (i32, i32) {
    %c0_i32 = arith.constant 0 : i32
    %c0_i32_0 = arith.constant 0 : i32
    return %arg0, %c0_i32 : i32, i32
  }
}

</mosaic_0001>

<llo_original>
// kernel: tpu_custom_call.1
$region0: #{tpu_custom_call.1}
  #allocation0 [shape = 'u32[]', space=smem, size = 0x4, offset = 0x4, fixed_abs, tag = 'smem constant byte address 0x4 - core index']
  #allocation1 [shape = 'u32[144,128]{1,0:T(1,128)}', space=vmem, size = 0x12000, scoped, tag = 'internal scratch']
  %s0 = inlined_call_operand.hbm [shape: f32[2,1024], index: 0, kind: input, shape index: {}]
  %s1 = inlined_call_operand.hbm [shape: f32[2,1024], index: 1, kind: input, shape index: {}]
  %s2 = inlined_call_operand.hbm [shape: f32[1,1024], index: 2, kind: input, shape index: {}]
  %s3 = inlined_call_operand.hbm [shape: f32[2,2048], index: 3, kind: output, shape index: {}]
  %s4 = sld [smem:[#allocation0]]
  $region34: #{tpu_custom_call.1} parent=0
    _
  %s6 = ssub.s32 1, %s4
  %s7 = scalar_select 0, %s6, %s4
  $region1: #{tpu_custom_call.1} parent=0
    #allocation2 [shape = 'u8[8192]{0}', space=vmem, size = 0x2000, scoped, tag = 'input window, operand 0, single buffered']
    #allocation3 [shape = 's32[1]{0}', space=sflag, size = 0x4, scoped, tag = 'scoped memory for tpu_custom_call.1']
    #allocation4 [shape = 's32[1]{0}', space=sflag, size = 0x4, scoped, tag = 'scoped memory for tpu_custom_call.1']
    #allocation5 [shape = 'u8[8192]{0}', space=vmem, size = 0x2000, scoped, tag = 'input window, operand 1, single buffered']
    #allocation6 [shape = 's32[1]{0}', space=sflag, size = 0x4, scoped, tag = 'scoped memory for tpu_custom_call.1']
    #allocation7 [shape = 'u8[4096]{0}', space=vmem, size = 0x1000, scoped, tag = 'input window, operand 2, single buffered']
    #allocation8 [shape = 'u8[16384]{0}', space=vmem, size = 0x4000, scoped, tag = 'output window, operand 0, single buffered']
    %8 = vsyncpa [#allocation3], 0
    %9 = vsyncpa [#allocation6], 0
    %10 = vsyncpa [#allocation4], 0
    // Predicated region
    $region2: #{tpu_custom_call.1} parent=1 // pred_check
      _
    $region3: #{tpu_custom_call.1} parent=1 // pred_check_branch
      %12 = sbr.rel (0) target = $region5
    $region4: #{tpu_custom_call.1} parent=1 // pred_region
      %s14 = ssub.s32 256, 256
      %15 = vsyncadd [#allocation3], %s14
      %s17 = sshll.u32 [#allocation2], 4
      %s18 = int_to_ptr.vmem [resolvable:$true] %s17
      %20 = dma.hbm_to_vmem [thread:$0]  %s0, 256, %s18, [#allocation3]
    $region5: #{tpu_custom_call.1} parent=1 // pred_fallthru
      _
    // Predicated region
    $region6: #{tpu_custom_call.1} parent=1 // pred_check
      _
    $region7: #{tpu_custom_call.1} parent=1 // pred_check_branch
      %22 = sbr.rel (0) target = $region9
    $region8: #{tpu_custom_call.1} parent=1 // pred_region
      %s24 = ssub.s32 256, 256
      %25 = vsyncadd [#allocation6], %s24
      %s27 = sshll.u32 [#allocation5], 4
      %s28 = int_to_ptr.vmem [resolvable:$true] %s27
      %30 = dma.hbm_to_vmem [thread:$0]  %s1, 256, %s28, [#allocation6]
    $region9: #{tpu_custom_call.1} parent=1 // pred_fallthru
      _
    // Predicated region
    $region10: #{tpu_custom_call.1} parent=1 // pred_check
      _
    $region11: #{tpu_custom_call.1} parent=1 // pred_check_branch
      %32 = sbr.rel (0) target = $region13
    $region12: #{tpu_custom_call.1} parent=1 // pred_region
      %s34 = ssub.s32 128, 128
      %35 = vsyncadd [#allocation6], %s34
      %s37 = sshll.u32 [#allocation7], 4
      %s38 = int_to_ptr.vmem [resolvable:$true] %s37
      %40 = dma.hbm_to_vmem [thread:$0]  %s2, 128, %s38, [#allocation6]
    $region13: #{tpu_custom_call.1} parent=1 // pred_fallthru
      _
    // Predicated region
    $region14: #{tpu_custom_call.1} parent=1 // pred_check
      _
    $region15: #{tpu_custom_call.1} parent=1 // pred_check_branch
      %42 = sbr.rel (0) target = $region17
    $region16: #{tpu_custom_call.1} parent=1 // pred_region
      %43 = dma.done [#allocation3], 256
    $region17: #{tpu_custom_call.1} parent=1 // pred_fallthru
      _
    // Predicated region
    $region18: #{tpu_custom_call.1} parent=1 // pred_check
      _
    $region19: #{tpu_custom_call.1} parent=1 // pred_check_branch
      %45 = sbr.rel (0) target = $region21
    $region20: #{tpu_custom_call.1} parent=1 // pred_region
      %46 = dma.done [#allocation6], 256
    $region21: #{tpu_custom_call.1} parent=1 // pred_fallthru
      _
    // Predicated region
    $region22: #{tpu_custom_call.1} parent=1 // pred_check
      _
    $region23: #{tpu_custom_call.1} parent=1 // pred_check_branch
      %48 = sbr.rel (0) target = $region25
    $region24: #{tpu_custom_call.1} parent=1 // pred_region
      %49 = dma.done [#allocation6], 128
    $region25: #{tpu_custom_call.1} parent=1 // pred_fallthru
      _
    %v50 = vld [vmem:[#allocation5] sm:$0xff]
    %v51 = vld [vmem:[#allocation5 + $0x8] sm:$0xff]
    %v52 = vld [vmem:[#allocation7] sm:$0xff]
    %v54 = vlaneseq
    %v55 = vshrl.u32 %v54, 7
    %v56 = vsub.s32 0, %v55
    %v57 = vrot.slane %v52, %v56
    %v58 = vlaneseq
    %v59 = vshrl.u32 %v58, 7
    %v60 = vsub.s32 1, %v59
    %v61 = vrot.slane %v52, %v60
    %v62 = vlaneseq
    %v63 = vshrl.u32 %v62, 7
    %v64 = vsub.s32 2, %v63
    %v65 = vrot.slane %v52, %v64
    %v66 = vlaneseq
    %v67 = vshrl.u32 %v66, 7
    %v68 = vsub.s32 3, %v67
    %v69 = vrot.slane %v52, %v68
    %v70 = vlaneseq
    %v71 = vshrl.u32 %v70, 7
    %v72 = vsub.s32 4, %v71
    %v73 = vrot.slane %v52, %v72
    %v74 = vlaneseq
    %v75 = vshrl.u32 %v74, 7
    %v76 = vsub.s32 5, %v75
    %v77 = vrot.slane %v52, %v76
    %v78 = vlaneseq
    %v79 = vshrl.u32 %v78, 7
    %v80 = vsub.s32 6, %v79
    %v81 = vrot.slane %v52, %v80
    %v82 = vlaneseq
    %v83 = vshrl.u32 %v82, 7
    %v84 = vsub.s32 7, %v83
    %v85 = vrot.slane %v52, %v84
    %v86 = vcombine.low %v57, %v61
    %v87 = vcombine.low %v65, %v69
    %v89 = vunpack.c.l.s4 1983009808
    %v90 = vunpack.c.0.s8 %v89
    %v91 = vlaneseq
    %v92 = vshrl.u32 %v91, 7
    %v93 = vsub.s32 %v90, %v92
    %v94 = vrot.slane %v86, %v93
    %v96 = vunpack.c.l.s4 1983009808
    %v97 = vunpack.c.0.s8 %v96
    %v98 = vlaneseq
    %v99 = vshrl.u32 %v98, 7
    %v100 = vsub.s32 %v97, %v99
    %v101 = vrot.slane %v87, %v100
    %v102 = vcombine.low %v94, %v101
    %v103 = vcombine.low %v73, %v77
    %v104 = vcombine.low %v81, %v85
    %v106 = vunpack.c.l.s4 1983009808
    %v107 = vunpack.c.0.s8 %v106
    %v108 = vlaneseq
    %v109 = vshrl.u32 %v108, 7
    %v110 = vsub.s32 %v107, %v109
    %v111 = vrot.slane %v103, %v110
    %v113 = vunpack.c.l.s4 1983009808
    %v114 = vunpack.c.0.s8 %v113
    %v115 = vlaneseq
    %v116 = vshrl.u32 %v115, 7
    %v117 = vsub.s32 %v114, %v116
    %v118 = vrot.slane %v104, %v117
    %v119 = vcombine.low %v111, %v118
    %vm122 = vcmp.lt.f32.partialorder %v50, %v102
    %vm123 = vcmp.lt.f32.partialorder %v51, %v119
    %v124 = vsel %vm122, 1, 0
    %v125 = vsel %vm123, 1, 0
    %v126 = vcvt.s32.f32 %v124
    %v127 = vcvt.s32.f32 %v125
    %v128 = vld [vmem:[#allocation2] sm:$0xff]
    %v129 = vld [vmem:[#allocation2 + $0x8] sm:$0xff]
    %v130 = vmul.f32 %v126, %v128
    %v131 = vmul.f32 %v127, %v129
    %132 = vst [vmem:[#allocation8] sm:$0xff] %v130
    %133 = vst [vmem:[#allocation8 + $0x8] sm:$0xff] %v131
    %134 = vst [vmem:[#allocation8 + $0x10] sm:$0xff] %v126
    %135 = vst [vmem:[#allocation8 + $0x18] sm:$0xff] %v127
    // Predicated region
    $region26: #{tpu_custom_call.1} parent=1 // pred_check
      _
    $region27: #{tpu_custom_call.1} parent=1 // pred_check_branch
      %137 = sbr.rel (0) target = $region29
    $region28: #{tpu_custom_call.1} parent=1 // pred_region
      %s139 = ssub.s32 512, 512
      %140 = vsyncadd [#allocation4], %s139
      %s142 = sshll.u32 [#allocation8], 4
      %s143 = int_to_ptr.vmem [resolvable:$true] %s142
      %145 = dma.vmem_to_hbm [thread:$0]  %s143, 512, %s3, [#allocation4]
    $region29: #{tpu_custom_call.1} parent=1 // pred_fallthru
      _
    // Predicated region
    $region30: #{tpu_custom_call.1} parent=1 // pred_check
      _
    $region31: #{tpu_custom_call.1} parent=1 // pred_check_branch
      %147 = sbr.rel (0) target = $region33
    $region32: #{tpu_custom_call.1} parent=1 // pred_region
      %148 = dma.done [#allocation4], 512
    $region33: #{tpu_custom_call.1} parent=1 // pred_fallthru
      _
    %149 = vsyncpa [#allocation3], 1
    %150 = vsyncpa [#allocation6], 1
    %151 = vsyncpa [#allocation4], 1

</llo_original>
